<compile_context>
chip_gen: v7x
topology: tpu7x:2x2x1
jax: 0.10.0
libtpu: 0.0.40
codegen_flags: <defaults>
</compile_context>

<pallas_src>
import jax
import jax.numpy as jnp
from jax.experimental import pallas as pl
from jax.experimental.pallas import tpu as pltpu


def attn_kernel(enc_ref, hid_ref, w_ref, b_ref, woa_ref, wob_ref, bo_ref,
                out_ref, loss_ref, scores_ref):
    # Recurrent state: hidden[0] + hidden[1]   (f32, small)
    hid = hid_ref[0] + hid_ref[1]                                   # (tb, H)

    # --- attention energy, algebraically refactored --------------------------
    # att[b,t] = sum_h (enc[b,t,:] @ W.T + bias)[h] * hid[b,h]
    #          = sum_k enc[b,t,k] * v[b,k] + c[b]
    # with v = hid @ W (W kept in PyTorch (out,in) layout) and c = <bias, hid>.
    v = jnp.dot(hid, w_ref[...], preferred_element_type=jnp.float32)  # (tb, H)
    c = jnp.sum(hid * b_ref[...], axis=-1, keepdims=True)             # (tb, 1)

    enc = enc_ref[...].astype(jnp.float32)          # bf16->f32 fused into consumers
    att = jnp.tanh(jnp.sum(enc * v[:, None, :], axis=-1) + c)         # (tb, T)

    # --- softmax over T (f32 on VPU/EUP) -------------------------------------
    m = jnp.max(att, axis=-1, keepdims=True)
    e = jnp.exp(att - m)
    denom = jnp.sum(e, axis=-1, keepdims=True)
    sm = e * pl.reciprocal(denom, approx=True)                         # (tb, T)
    scores_ref[...] = sm

    # --- MSE loss, analytic: diff = enc*(1-sm) --------------------------------
    # sum_h diff^2 = (1-sm[b,t])^2 * sum_h enc[b,t,h]^2  -> no (tb,T,H) temps.
    sq = jnp.sum(enc * enc, axis=-1)                                   # (tb, T)
    w1 = 1.0 - sm
    loss_ref[...] = jnp.sum(w1 * w1 * sq, axis=-1, keepdims=True)      # (tb, 1)

    # --- context vector as a fused weighted reduction -------------------------
    ctx = jnp.sum(enc * sm[:, :, None], axis=1)                        # (tb, H)

    # --- output projection: cat((ctx, hid)) @ Wout.T folded into two bf16 dots
    o = (jnp.dot(ctx.astype(jnp.bfloat16), woa_ref[...],
                 preferred_element_type=jnp.float32)
         + jnp.dot(hid.astype(jnp.bfloat16), wob_ref[...],
                   preferred_element_type=jnp.float32)
         + bo_ref[...])
    out_ref[...] = jnp.tanh(o)


def _vmem_limit_bytes():
    """Generation-aware scoped-VMEM limit: keep headroom on v7x (64 MiB
    physical per core), go larger on v5e/v6e (128 MiB physical)."""
    try:
        kind = jax.devices()[0].device_kind.lower()
    except Exception:
        kind = ""
    if "v7" in kind:
        return 48 * 1024 * 1024
    return 64 * 1024 * 1024


def _pick_tile_b(B, T, H, *, enc_tile_budget=4 << 20):
    """Pick the batch tile (multiple of 8).

    Per-step working set ~= double-buffered bf16 enc tile + a couple of
    transient f32 products + O(tile_b*(T+H)) small arrays, so sizing the bf16
    enc tile at ~4 MiB keeps the total well under a 48 MiB scoped limit (v7x
    safe) while being big enough (>=2-4 MiB) to approach the HBM roofline.
    """
    row_bytes = max(1, T * H * 2)                        # bf16 enc bytes per batch row
    max_rows = max(8, (enc_tile_budget // row_bytes) // 8 * 8)
    if B >= 16:
        # Guarantee >= 2 grid steps so the "parallel" batch axis can shard
        # across v7x's two TensorCores.
        half = ((-(-B // 2)) + 7) // 8 * 8
        max_rows = min(max_rows, max(8, half))
    tile = min(max_rows, (B + 7) // 8 * 8)
    # Prefer a multiple-of-8 divisor of B (no padding); otherwise pad B up.
    for cand in range(tile, 7, -8):
        if B % cand == 0:
            return cand
    return tile


def attn_forward(hidden, enc_outputs, params, *, tile_b=None):
    """hidden: (2, B, H) stacked (h, c); enc_outputs: (B, T, H).
    Returns (out (B,H), loss (), scores (B,T,1)) matching the PyTorch module."""
    B, T, H = enc_outputs.shape
    if tile_b is None:
        tile_b = _pick_tile_b(B, T, H)

    # Pad the batch so every grid step is a full tile (tile_b % 8 == 0).
    # Zero-padded rows contribute exactly 0 to the loss and are sliced off.
    Bp = -(-B // tile_b) * tile_b
    if Bp != B:
        enc_outputs = jnp.pad(enc_outputs, ((0, Bp - B), (0, 0), (0, 0)))
        hidden = jnp.pad(hidden, ((0, 0), (0, Bp - B), (0, 0)))
    num_tiles = Bp // tile_b

    # bf16 stream for the HBM-dominant operand and the output projection;
    # the small first-linear weight stays f32 so softmax inputs keep precision.
    enc_bf = enc_outputs.astype(jnp.bfloat16)
    hidden = hidden.astype(jnp.float32)
    w = params["w"].astype(jnp.float32)                  # (H, H), (out, in) layout
    b = params["b"].reshape(1, H).astype(jnp.float32)
    woa = params["wo"][:, :H].T.astype(jnp.bfloat16)     # (H, H) acts on context
    wob = params["wo"][:, H:].T.astype(jnp.bfloat16)     # (H, H) acts on hidden
    bo = params["bo"].reshape(1, H).astype(jnp.float32)

    out, loss_rows, scores = pl.pallas_call(
        attn_kernel,
        out_shape=(
            jax.ShapeDtypeStruct((Bp, H), jnp.float32),
            jax.ShapeDtypeStruct((Bp, 1), jnp.float32),
            jax.ShapeDtypeStruct((Bp, T), jnp.float32),
        ),
        grid=(num_tiles,),
        in_specs=[
            pl.BlockSpec((tile_b, T, H), lambda i: (i, 0, 0)),   # enc (bf16)
            pl.BlockSpec((2, tile_b, H), lambda i: (0, i, 0)),   # hidden (f32)
            pl.BlockSpec((H, H), lambda i: (0, 0)),              # W (f32)
            pl.BlockSpec((1, H), lambda i: (0, 0)),              # bias
            pl.BlockSpec((H, H), lambda i: (0, 0)),              # Wout[:, :H]^T (bf16)
            pl.BlockSpec((H, H), lambda i: (0, 0)),              # Wout[:, H:]^T (bf16)
            pl.BlockSpec((1, H), lambda i: (0, 0)),              # bias_out
        ],
        out_specs=(
            pl.BlockSpec((tile_b, H), lambda i: (i, 0)),         # out
            pl.BlockSpec((tile_b, 1), lambda i: (i, 0)),         # per-row sum of squares
            pl.BlockSpec((tile_b, T), lambda i: (i, 0)),         # scores
        ),
        compiler_params=pltpu.CompilerParams(
            dimension_semantics=("parallel",),          # megacore-shard batch
            vmem_limit_bytes=_vmem_limit_bytes(),
        ),
    )(enc_bf, hidden, w, b, woa, wob, bo)

    loss = jnp.sum(loss_rows[:B]) / (B * T * H)          # finish F.mse_loss mean
    return out[:B], loss, scores[:B, :, None]            # scores: (B, T, 1)


def attn_reference(hidden, enc_outputs, params):
    """Pure-JAX f32 reference mirroring the PyTorch forward pass."""
    w, b, wo, bo = params["w"], params["b"], params["wo"], params["bo"]
    x = enc_outputs @ w.T + b
    hid = hidden[0] + hidden[1]
    att = jnp.tanh(jnp.einsum("bth,bh->bt", x, hid))
    sm = jax.nn.softmax(att, axis=-1)
    scores = sm[..., None]
    output = enc_outputs * scores
    loss = jnp.mean((enc_outputs - output) ** 2)
    out = jnp.sum(output, axis=1)
    in_lin = jnp.concatenate([out, hid], axis=-1)
    out = jnp.tanh(in_lin @ wo.T + bo)
    return out, loss, scores


if __name__ == "__main__":
    B, T, H = 2, 8, 32          # batch, timesteps, n_hidden

    key = jax.random.PRNGKey(0)
    k1, k2, k3, k4, k5, k6 = jax.random.split(key, 6)

    # deterministic "parameters" (shapes follow nn.Linear(H, H) / nn.Linear(2H, H))
    params = {
        "w":  0.1 * jax.random.normal(k1, (H, H), jnp.float32),
        "b":  0.1 * jax.random.normal(k2, (H,), jnp.float32),
        "wo": 0.1 * jax.random.normal(k3, (H, 2 * H), jnp.float32),
        "bo": 0.1 * jax.random.normal(k4, (H,), jnp.float32),
    }

    hidden = jax.random.normal(k5, (2, B, H), jnp.float32)       # stacked (h, c)
    enc_outputs = jax.random.normal(k6, (B, T, H), jnp.float32)

    out, loss, scores = attn_forward(hidden, enc_outputs, params)
    jax.block_until_ready((out, loss, scores))

    out_r, loss_r, scores_r = attn_reference(hidden, enc_outputs, params)
    assert jnp.allclose(out, out_r, rtol=5e-2, atol=5e-2)
    assert jnp.allclose(loss, loss_r, rtol=5e-2, atol=5e-2)
    assert jnp.allclose(scores, scores_r, rtol=5e-2, atol=5e-2)

    print("KERNEL_OK")
</pallas_src>

<mosaic_0001>
module attributes {stable_mosaic.version = 11 : i64} {
  func.func @attn_kernel(%arg0: i32, %arg1: memref<8x8x32xbf16, #tpu.memory_space<vmem>>, %arg2: memref<2x8x32xf32, #tpu.memory_space<vmem>>, %arg3: memref<32x32xf32, #tpu.memory_space<vmem>>, %arg4: memref<1x32xf32, #tpu.memory_space<vmem>>, %arg5: memref<32x32xbf16, #tpu.memory_space<vmem>>, %arg6: memref<32x32xbf16, #tpu.memory_space<vmem>>, %arg7: memref<1x32xf32, #tpu.memory_space<vmem>>, %arg8: memref<8x32xf32, #tpu.memory_space<vmem>>, %arg9: memref<8x1xf32, #tpu.memory_space<vmem>>, %arg10: memref<8x8xf32, #tpu.memory_space<vmem>>) attributes {dimension_semantics = [#tpu.dimension_semantics<parallel>], iteration_bounds = array<i64: 1>, scalar_prefetch = 0 : i64, scratch_operands = 0 : i64, tpu.core_type = #tpu.core_type<tc>, window_params = [{transform_indices = @transform_0, window_bounds = array<i64: 8, 8, 32>}, {transform_indices = @transform_1, window_bounds = array<i64: 2, 8, 32>}, {pipeline_mode = #tpu.pipeline_mode<synchronous>, transform_indices = @transform_2, window_bounds = array<i64: 32, 32>}, {pipeline_mode = #tpu.pipeline_mode<synchronous>, transform_indices = @transform_3, window_bounds = array<i64: 1, 32>}, {pipeline_mode = #tpu.pipeline_mode<synchronous>, transform_indices = @transform_4, window_bounds = array<i64: 32, 32>}, {pipeline_mode = #tpu.pipeline_mode<synchronous>, transform_indices = @transform_5, window_bounds = array<i64: 32, 32>}, {pipeline_mode = #tpu.pipeline_mode<synchronous>, transform_indices = @transform_6, window_bounds = array<i64: 1, 32>}, {transform_indices = @transform_7, window_bounds = array<i64: 8, 32>}, {transform_indices = @transform_8, window_bounds = array<i64: 8, 1>}, {transform_indices = @transform_9, window_bounds = array<i64: 8, 8>}]} {
    %c0 = arith.constant 0 : index
    %c0_0 = arith.constant 0 : index
    %c0_1 = arith.constant 0 : index
    %0 = vector.load %arg2[%c0, %c0_0, %c0_1] : memref<2x8x32xf32, #tpu.memory_space<vmem>>, vector<1x8x32xf32>
    %1 = vector.shape_cast %0 : vector<1x8x32xf32> to vector<8x32xf32>
    %c1 = arith.constant 1 : index
    %c0_2 = arith.constant 0 : index
    %c0_3 = arith.constant 0 : index
    %2 = vector.load %arg2[%c1, %c0_2, %c0_3] : memref<2x8x32xf32, #tpu.memory_space<vmem>>, vector<1x8x32xf32>
    %3 = vector.shape_cast %2 : vector<1x8x32xf32> to vector<8x32xf32>
    %4 = arith.addf %1, %3 : vector<8x32xf32>
    %c0_4 = arith.constant 0 : index
    %c0_5 = arith.constant 0 : index
    %5 = vector.load %arg3[%c0_4, %c0_5] : memref<32x32xf32, #tpu.memory_space<vmem>>, vector<32x32xf32>
    %cst = arith.constant dense<0.000000e+00> : vector<8x32xf32>
    %6 = tpu.matmul %4, %5, %cst {dimension_numbers = #tpu.dot_dimension_numbers<[1], [0], [0], [1], [0, 0, 1, 1], [], []>} : vector<8x32xf32>, vector<32x32xf32>, vector<8x32xf32> -> vector<8x32xf32>
    %c0_6 = arith.constant 0 : index
    %c0_7 = arith.constant 0 : index
    %7 = vector.load %arg4[%c0_6, %c0_7] : memref<1x32xf32, #tpu.memory_space<vmem>>, vector<1x32xf32>
    %8 = vector.broadcast %7 : vector<1x32xf32> to vector<8x32xf32>
    %9 = arith.mulf %4, %8 : vector<8x32xf32>
    %cst_8 = arith.constant dense<0.000000e+00> : vector<8xf32>
    %10 = vector.multi_reduction <add>, %9, %cst_8 [1] : vector<8x32xf32> to vector<8xf32>
    %11 = vector.shape_cast %10 : vector<8xf32> to vector<8x1xf32>
    %c0_9 = arith.constant 0 : index
    %c0_10 = arith.constant 0 : index
    %c0_11 = arith.constant 0 : index
    %12 = vector.load %arg1[%c0_9, %c0_10, %c0_11] : memref<8x8x32xbf16, #tpu.memory_space<vmem>>, vector<8x8x32xbf16>
    %13 = arith.extf %12 : vector<8x8x32xbf16> to vector<8x8x32xf32>
    %14 = vector.shape_cast %6 : vector<8x32xf32> to vector<8x1x32xf32>
    %15 = vector.broadcast %14 : vector<8x1x32xf32> to vector<8x8x32xf32>
    %16 = arith.mulf %13, %15 : vector<8x8x32xf32>
    %cst_12 = arith.constant dense<0.000000e+00> : vector<8x8xf32>
    %17 = vector.multi_reduction <add>, %16, %cst_12 [2] : vector<8x8x32xf32> to vector<8x8xf32>
    %18 = vector.broadcast %11 : vector<8x1xf32> to vector<8x8xf32>
    %19 = arith.addf %17, %18 : vector<8x8xf32>
    %20 = math.tanh %19 : vector<8x8xf32>
    %cst_13 = arith.constant dense<0xFF800000> : vector<8xf32>
    %21 = vector.multi_reduction <maximumf>, %20, %cst_13 [1] : vector<8x8xf32> to vector<8xf32>
    %22 = vector.shape_cast %21 : vector<8xf32> to vector<8x1xf32>
    %23 = vector.broadcast %22 : vector<8x1xf32> to vector<8x8xf32>
    %24 = arith.subf %20, %23 : vector<8x8xf32>
    %25 = math.exp %24 : vector<8x8xf32>
    %cst_14 = arith.constant dense<0.000000e+00> : vector<8xf32>
    %26 = vector.multi_reduction <add>, %25, %cst_14 [1] : vector<8x8xf32> to vector<8xf32>
    %27 = vector.shape_cast %26 : vector<8xf32> to vector<8x1xf32>
    %28 = tpu.reciprocal %27 {approx = true} : vector<8x1xf32> -> vector<8x1xf32>
    %29 = vector.broadcast %28 : vector<8x1xf32> to vector<8x8xf32>
    %30 = arith.mulf %25, %29 : vector<8x8xf32>
    %c0_15 = arith.constant 0 : index
    %c0_16 = arith.constant 0 : index
    %31 = vector.load %arg10[%c0_15, %c0_16] : memref<8x8xf32, #tpu.memory_space<vmem>>, vector<8x8xf32>
    tpu.vector_store %arg10[%c0_15, %c0_16], %30 {strides = array<i32>} : memref<8x8xf32, #tpu.memory_space<vmem>>, vector<8x8xf32>,
    %32 = arith.mulf %13, %13 : vector<8x8x32xf32>
    %cst_17 = arith.constant dense<0.000000e+00> : vector<8x8xf32>
    %33 = vector.multi_reduction <add>, %32, %cst_17 [2] : vector<8x8x32xf32> to vector<8x8xf32>
    %cst_18 = arith.constant 1.000000e+00 : f32
    %34 = vector.broadcast %cst_18 : f32 to vector<8x8xf32>
    %35 = arith.subf %34, %30 : vector<8x8xf32>
    %36 = arith.mulf %35, %35 : vector<8x8xf32>
    %37 = arith.mulf %36, %33 : vector<8x8xf32>
    %cst_19 = arith.constant dense<0.000000e+00> : vector<8xf32>
    %38 = vector.multi_reduction <add>, %37, %cst_19 [1] : vector<8x8xf32> to vector<8xf32>
    %39 = vector.shape_cast %38 : vector<8xf32> to vector<8x1xf32>
    %c0_20 = arith.constant 0 : index
    %c0_21 = arith.constant 0 : index
    %40 = vector.load %arg9[%c0_20, %c0_21] : memref<8x1xf32, #tpu.memory_space<vmem>>, vector<8x1xf32>
    tpu.vector_store %arg9[%c0_20, %c0_21], %39 {strides = array<i32>} : memref<8x1xf32, #tpu.memory_space<vmem>>, vector<8x1xf32>,
    %41 = vector.shape_cast %30 : vector<8x8xf32> to vector<8x8x1xf32>
    %42 = vector.broadcast %41 : vector<8x8x1xf32> to vector<8x8x32xf32>
    %43 = arith.mulf %13, %42 : vector<8x8x32xf32>
    %cst_22 = arith.constant dense<0.000000e+00> : vector<8x32xf32>
    %44 = vector.multi_reduction <add>, %43, %cst_22 [1] : vector<8x8x32xf32> to vector<8x32xf32>
    %45 = arith.truncf %44 : vector<8x32xf32> to vector<8x32xbf16>
    %c0_23 = arith.constant 0 : index
    %c0_24 = arith.constant 0 : index
    %46 = vector.load %arg5[%c0_23, %c0_24] : memref<32x32xbf16, #tpu.memory_space<vmem>>, vector<32x32xbf16>
    %cst_25 = arith.constant dense<0.000000e+00> : vector<8x32xf32>
    %47 = tpu.matmul %45, %46, %cst_25 {dimension_numbers = #tpu.dot_dimension_numbers<[1], [0], [0], [1], [0, 0, 1, 1], [], []>} : vector<8x32xbf16>, vector<32x32xbf16>, vector<8x32xf32> -> vector<8x32xf32>
    %48 = arith.truncf %4 : vector<8x32xf32> to vector<8x32xbf16>
    %c0_26 = arith.constant 0 : index
    %c0_27 = arith.constant 0 : index
    %49 = vector.load %arg6[%c0_26, %c0_27] : memref<32x32xbf16, #tpu.memory_space<vmem>>, vector<32x32xbf16>
    %cst_28 = arith.constant dense<0.000000e+00> : vector<8x32xf32>
    %50 = tpu.matmul %48, %49, %cst_28 {dimension_numbers = #tpu.dot_dimension_numbers<[1], [0], [0], [1], [0, 0, 1, 1], [], []>} : vector<8x32xbf16>, vector<32x32xbf16>, vector<8x32xf32> -> vector<8x32xf32>
    %51 = arith.addf %47, %50 : vector<8x32xf32>
    %c0_29 = arith.constant 0 : index
    %c0_30 = arith.constant 0 : index
    %52 = vector.load %arg7[%c0_29, %c0_30] : memref<1x32xf32, #tpu.memory_space<vmem>>, vector<1x32xf32>
    %53 = vector.broadcast %52 : vector<1x32xf32> to vector<8x32xf32>
    %54 = arith.addf %51, %53 : vector<8x32xf32>
    %55 = math.tanh %54 : vector<8x32xf32>
    %c0_31 = arith.constant 0 : index
    %c0_32 = arith.constant 0 : index
    %56 = vector.load %arg8[%c0_31, %c0_32] : memref<8x32xf32, #tpu.memory_space<vmem>>, vector<8x32xf32>
    tpu.vector_store %arg8[%c0_31, %c0_32], %55 {strides = array<i32>} : memref<8x32xf32, #tpu.memory_space<vmem>>, vector<8x32xf32>,
    return
  }
  func.func @transform_0(%arg0: i32) -> (i32, i32, i32) {
    %c0_i32 = arith.constant 0 : i32
    %c0_i32_0 = arith.constant 0 : i32
    %c0_i32_1 = arith.constant 0 : i32
    return %arg0, %c0_i32, %c0_i32_0 : i32, i32, i32
  }
  func.func @transform_1(%arg0: i32) -> (i32, i32, i32) {
    %c0_i32 = arith.constant 0 : i32
    %c0_i32_0 = arith.constant 0 : i32
    %c0_i32_1 = arith.constant 0 : i32
    return %c0_i32, %arg0, %c0_i32_0 : i32, i32, i32
  }
  func.func @transform_2(%arg0: i32) -> (i32, i32) {
    %c0_i32 = arith.constant 0 : i32
    %c0_i32_0 = arith.constant 0 : i32
    %c0_i32_1 = arith.constant 0 : i32
    return %c0_i32, %c0_i32_0 : i32, i32
  }
  func.func @transform_3(%arg0: i32) -> (i32, i32) {
    %c0_i32 = arith.constant 0 : i32
    %c0_i32_0 = arith.constant 0 : i32
    %c0_i32_1 = arith.constant 0 : i32
    return %c0_i32, %c0_i32_0 : i32, i32
  }
  func.func @transform_4(%arg0: i32) -> (i32, i32) {
    %c0_i32 = arith.constant 0 : i32
    %c0_i32_0 = arith.constant 0 : i32
    %c0_i32_1 = arith.constant 0 : i32
    return %c0_i32, %c0_i32_0 : i32, i32
  }
  func.func @transform_5(%arg0: i32) -> (i32, i32) {
    %c0_i32 = arith.constant 0 : i32
    %c0_i32_0 = arith.constant 0 : i32
    %c0_i32_1 = arith.constant 0 : i32
    return %c0_i32, %c0_i32_0 : i32, i32
  }
  func.func @transform_6(%arg0: i32) -> (i32, i32) {
    %c0_i32 = arith.constant 0 : i32
    %c0_i32_0 = arith.constant 0 : i32
    %c0_i32_1 = arith.constant 0 : i32
    return %c0_i32, %c0_i32_0 : i32, i32
  }
  func.func @transform_7(%arg0: i32) -> (i32, i32) {
    %c0_i32 = arith.constant 0 : i32
    %c0_i32_0 = arith.constant 0 : i32
    return %arg0, %c0_i32 : i32, i32
  }
  func.func @transform_8(%arg0: i32) -> (i32, i32) {
    %c0_i32 = arith.constant 0 : i32
    %c0_i32_0 = arith.constant 0 : i32
    return %arg0, %c0_i32 : i32, i32
  }
  func.func @transform_9(%arg0: i32) -> (i32, i32) {
    %c0_i32 = arith.constant 0 : i32
    %c0_i32_0 = arith.constant 0 : i32
    return %arg0, %c0_i32 : i32, i32
  }
}

</mosaic_0001>

<llo_original>
// kernel: tpu_custom_call.1
$region0: #{tpu_custom_call.1}
  #allocation0 [shape = 'u32[]', space=smem, size = 0x4, offset = 0x4, fixed_abs, tag = 'smem constant byte address 0x4 - core index']
  #allocation1 [shape = 'u32[144,128]{1,0:T(1,128)}', space=vmem, size = 0x12000, scoped, tag = 'internal scratch']
  %s0 = inlined_call_operand.hbm [shape: bf16[8,8,32], index: 0, kind: input, shape index: {}]
  %s1 = inlined_call_operand.hbm [shape: f32[2,8,32], index: 1, kind: input, shape index: {}]
  %s2 = inlined_call_operand.hbm [shape: f32[32,32], index: 2, kind: input, shape index: {}]
  %s3 = inlined_call_operand.hbm [shape: f32[1,32], index: 3, kind: input, shape index: {}]
  %s4 = inlined_call_operand.hbm [shape: bf16[32,32], index: 4, kind: input, shape index: {}]
  %s5 = inlined_call_operand.hbm [shape: bf16[32,32], index: 5, kind: input, shape index: {}]
  %s6 = inlined_call_operand.hbm [shape: f32[1,32], index: 6, kind: input, shape index: {}]
  %s7 = inlined_call_operand.hbm [shape: f32[8,32], index: 7, kind: output, shape index: {0}]
  %s8 = inlined_call_operand.hbm [shape: f32[8,1], index: 8, kind: output, shape index: {1}]
  %s9 = inlined_call_operand.hbm [shape: f32[8,8], index: 9, kind: output, shape index: {2}]
  %10 = xla_tuple %s7, %s8, %s9
  %s11 = sld [smem:[#allocation0]]
  $region82: #{tpu_custom_call.1} parent=0
    _
  %s13 = ssub.s32 1, %s11
  %s14 = scalar_select 0, %s13, %s11
  $region1: #{tpu_custom_call.1} parent=0
    #allocation2 [shape = 'u8[16384]{0}', space=vmem, size = 0x4000, scoped, tag = 'input window, operand 0, single buffered']
    #allocation3 [shape = 's32[1]{0}', space=sflag, size = 0x4, scoped, tag = 'scoped memory for tpu_custom_call.1']
    #allocation4 [shape = 's32[1]{0}', space=sflag, size = 0x4, scoped, tag = 'scoped memory for tpu_custom_call.1']
    #allocation5 [shape = 'u8[8192]{0}', space=vmem, size = 0x2000, scoped, tag = 'input window, operand 1, single buffered']
    #allocation6 [shape = 's32[1]{0}', space=sflag, size = 0x4, scoped, tag = 'scoped memory for tpu_custom_call.1']
    #allocation7 [shape = 'u8[16384]{0}', space=vmem, size = 0x4000, scoped, tag = 'input window, operand 2, single buffered']
    #allocation8 [shape = 'u8[512]{0}', space=vmem, size = 0x400, scoped, tag = 'input window, operand 3, single buffered']
    #allocation9 [shape = 's32[1]{0}', space=sflag, size = 0x4, scoped, tag = 'scoped memory for tpu_custom_call.1']
    #allocation10 [shape = 'u8[8192]{0}', space=vmem, size = 0x2000, scoped, tag = 'input window, operand 4, single buffered']
    #allocation11 [shape = 'u8[8192]{0}', space=vmem, size = 0x2000, scoped, tag = 'input window, operand 5, single buffered']
    #allocation12 [shape = 's32[1]{0}', space=sflag, size = 0x4, scoped, tag = 'scoped memory for tpu_custom_call.1']
    #allocation13 [shape = 'u8[512]{0}', space=vmem, size = 0x400, scoped, tag = 'input window, operand 6, single buffered']
    #allocation14 [shape = 'u8[4096]{0}', space=vmem, size = 0x1000, scoped, tag = 'output window, operand 0, single buffered']
    #allocation15 [shape = 'u8[4096]{0}', space=vmem, size = 0x1000, scoped, tag = 'output window, operand 1, single buffered']
    #allocation16 [shape = 's32[1]{0}', space=sflag, size = 0x4, scoped, tag = 'scoped memory for tpu_custom_call.1']
    #allocation17 [shape = 'u8[4096]{0}', space=vmem, size = 0x1000, scoped, tag = 'output window, operand 2, single buffered']
    %15 = vsyncpa [#allocation3], 0
    %16 = vsyncpa [#allocation6], 0
    %17 = vsyncpa [#allocation9], 0
    %18 = vsyncpa [#allocation12], 0
    %19 = vsyncpa [#allocation4], 0
    %20 = vsyncpa [#allocation16], 0
    // Predicated region
    $region2: #{tpu_custom_call.1} parent=1 // pred_check
      _
    $region3: #{tpu_custom_call.1} parent=1 // pred_check_branch
      %22 = sbr.rel (0) target = $region5
    $region4: #{tpu_custom_call.1} parent=1 // pred_region
      %s24 = ssub.s32 512, 512
      %25 = vsyncadd [#allocation3], %s24
      %s26 = sshll.u32 [#allocation2], 4
      %s27 = int_to_ptr.vmem [resolvable:$true] %s26
      %32 = dma.hbm_to_vmem [thread:$0]  %s0, 512, %s27, [#allocation3], 64, 64, 4
    $region5: #{tpu_custom_call.1} parent=1 // pred_fallthru
      _
    // Predicated region
    $region6: #{tpu_custom_call.1} parent=1 // pred_check
      _
    $region7: #{tpu_custom_call.1} parent=1 // pred_check_branch
      %34 = sbr.rel (0) target = $region9
    $region8: #{tpu_custom_call.1} parent=1 // pred_region
      %s36 = ssub.s32 256, 256
      %37 = vsyncadd [#allocation6], %s36
      %s38 = sshll.u32 [#allocation5], 4
      %s39 = int_to_ptr.vmem [resolvable:$true] %s38
      %44 = dma.hbm_to_vmem [thread:$0]  %s1, 256, %s39, [#allocation6], 128, 128, 8
    $region9: #{tpu_custom_call.1} parent=1 // pred_fallthru
      _
    // Predicated region
    $region10: #{tpu_custom_call.1} parent=1 // pred_check
      _
    $region11: #{tpu_custom_call.1} parent=1 // pred_check_branch
      %46 = sbr.rel (0) target = $region13
    $region12: #{tpu_custom_call.1} parent=1 // pred_region
      %s48 = ssub.s32 512, 512
      %49 = vsyncadd [#allocation6], %s48
      %s50 = sshll.u32 [#allocation7], 4
      %s51 = int_to_ptr.vmem [resolvable:$true] %s50
      %56 = dma.hbm_to_vmem [thread:$0]  %s2, 512, %s51, [#allocation6], 128, 128, 8
    $region13: #{tpu_custom_call.1} parent=1 // pred_fallthru
      _
    // Predicated region
    $region14: #{tpu_custom_call.1} parent=1 // pred_check
      _
    $region15: #{tpu_custom_call.1} parent=1 // pred_check_branch
      %58 = sbr.rel (0) target = $region17
    $region16: #{tpu_custom_call.1} parent=1 // pred_region
      %s60 = ssub.s32 16, 16
      %61 = vsyncadd [#allocation9], %s60
      %s63 = sshll.u32 [#allocation8], 4
      %s64 = int_to_ptr.vmem [resolvable:$true] %s63
      %66 = dma.hbm_to_vmem [thread:$0]  %s3, 16, %s64, [#allocation9]
    $region17: #{tpu_custom_call.1} parent=1 // pred_fallthru
      _
    // Predicated region
    $region18: #{tpu_custom_call.1} parent=1 // pred_check
      _
    $region19: #{tpu_custom_call.1} parent=1 // pred_check_branch
      %68 = sbr.rel (0) target = $region21
    $region20: #{tpu_custom_call.1} parent=1 // pred_region
      %s70 = ssub.s32 256, 256
      %71 = vsyncadd [#allocation9], %s70
      %s72 = sshll.u32 [#allocation10], 4
      %s73 = int_to_ptr.vmem [resolvable:$true] %s72
      %78 = dma.hbm_to_vmem [thread:$0]  %s4, 256, %s73, [#allocation9], 64, 64, 4
    $region21: #{tpu_custom_call.1} parent=1 // pred_fallthru
      _
    // Predicated region
    $region22: #{tpu_custom_call.1} parent=1 // pred_check
      _
    $region23: #{tpu_custom_call.1} parent=1 // pred_check_branch
      %80 = sbr.rel (0) target = $region25
    $region24: #{tpu_custom_call.1} parent=1 // pred_region
      %s82 = ssub.s32 256, 256
      %83 = vsyncadd [#allocation12], %s82
      %s84 = sshll.u32 [#allocation11], 4
      %s85 = int_to_ptr.vmem [resolvable:$true] %s84
      %90 = dma.hbm_to_vmem [thread:$0]  %s5, 256, %s85, [#allocation12], 64, 64, 4
    $region25: #{tpu_custom_call.1} parent=1 // pred_fallthru
      _
    // Predicated region
    $region26: #{tpu_custom_call.1} parent=1 // pred_check
      _
    $region27: #{tpu_custom_call.1} parent=1 // pred_check_branch
      %92 = sbr.rel (0) target = $region29
    $region28: #{tpu_custom_call.1} parent=1 // pred_region
      %s94 = ssub.s32 16, 16
      %95 = vsyncadd [#allocation12], %s94
      %s97 = sshll.u32 [#allocation13], 4
      %s98 = int_to_ptr.vmem [resolvable:$true] %s97
      %100 = dma.hbm_to_vmem [thread:$0]  %s6, 16, %s98, [#allocation12]
    $region29: #{tpu_custom_call.1} parent=1 // pred_fallthru
      _
    // Predicated region
    $region30: #{tpu_custom_call.1} parent=1 // pred_check
      _
    $region31: #{tpu_custom_call.1} parent=1 // pred_check_branch
      %102 = sbr.rel (0) target = $region33
    $region32: #{tpu_custom_call.1} parent=1 // pred_region
      %103 = dma.done [#allocation3], 512
    $region33: #{tpu_custom_call.1} parent=1 // pred_fallthru
      _
    // Predicated region
    $region34: #{tpu_custom_call.1} parent=1 // pred_check
      _
    $region35: #{tpu_custom_call.1} parent=1 // pred_check_branch
      %105 = sbr.rel (0) target = $region37
    $region36: #{tpu_custom_call.1} parent=1 // pred_region
      %106 = dma.done [#allocation6], 256
    $region37: #{tpu_custom_call.1} parent=1 // pred_fallthru
      _
    // Predicated region
    $region38: #{tpu_custom_call.1} parent=1 // pred_check
      _
    $region39: #{tpu_custom_call.1} parent=1 // pred_check_branch
      %108 = sbr.rel (0) target = $region41
    $region40: #{tpu_custom_call.1} parent=1 // pred_region
      %109 = dma.done [#allocation6], 512
    $region41: #{tpu_custom_call.1} parent=1 // pred_fallthru
      _
    // Predicated region
    $region42: #{tpu_custom_call.1} parent=1 // pred_check
      _
    $region43: #{tpu_custom_call.1} parent=1 // pred_check_branch
      %111 = sbr.rel (0) target = $region45
    $region44: #{tpu_custom_call.1} parent=1 // pred_region
      %112 = dma.done [#allocation9], 16
    $region45: #{tpu_custom_call.1} parent=1 // pred_fallthru
      _
    // Predicated region
    $region46: #{tpu_custom_call.1} parent=1 // pred_check
      _
    $region47: #{tpu_custom_call.1} parent=1 // pred_check_branch
      %114 = sbr.rel (0) target = $region49
    $region48: #{tpu_custom_call.1} parent=1 // pred_region
      %115 = dma.done [#allocation9], 256
    $region49: #{tpu_custom_call.1} parent=1 // pred_fallthru
      _
    // Predicated region
    $region50: #{tpu_custom_call.1} parent=1 // pred_check
      _
    $region51: #{tpu_custom_call.1} parent=1 // pred_check_branch
      %117 = sbr.rel (0) target = $region53
    $region52: #{tpu_custom_call.1} parent=1 // pred_region
      %118 = dma.done [#allocation12], 256
    $region53: #{tpu_custom_call.1} parent=1 // pred_fallthru
      _
    // Predicated region
    $region54: #{tpu_custom_call.1} parent=1 // pred_check
      _
    $region55: #{tpu_custom_call.1} parent=1 // pred_check_branch
      %120 = sbr.rel (0) target = $region57
    $region56: #{tpu_custom_call.1} parent=1 // pred_region
      %121 = dma.done [#allocation12], 16
    $region57: #{tpu_custom_call.1} parent=1 // pred_fallthru
      _
    %v123 = vld [vmem:[#allocation5] sm:$0xff]
    %s124 = scalar_lea.vmem [#allocation5], 8
    %v125 = vld [vmem:[%s124] sm:$0xff]
    %v126 = vadd.f32 %v123, %v125
    %v127 = vld [vmem:[#allocation7] sm:$0xff]
    %v128 = vld [vmem:[#allocation7 + $0x8] sm:$0xff]
    %v129 = vld [vmem:[#allocation7 + $0x10] sm:$0xff]
    %v130 = vld [vmem:[#allocation7 + $0x18] sm:$0xff]
    %vm131 = vcmask 261120
    %v133 = vsel %vm131, %v126, 0
    %135 = vmatprep.subr.mxu0 0.0
    %136 = vmatpush1.msra.mxu0 %v127
    %137 = vmatprep.subr.mxu0 0.0
    %138 = vmatpush1.msra.mxu0 %v128
    %139 = vmatprep.subr.mxu0 0.0
    %140 = vmatpush1.msra.mxu0 %v129
    %141 = vmatprep.subr.mxu0 0.0
    %142 = vmatpush1.msra.mxu0 %v130
    %143 = vmatprep.subr.mxu0 0.0
    %144 = vmatpush1.msra.mxu0 0.0
    %145 = vmatprep.subr.mxu0 0.0
    %146 = vmatpush1.msra.mxu0 0.0
    %147 = vmatprep.subr.mxu0 0.0
    %148 = vmatpush1.msra.mxu0 0.0
    %149 = vmatprep.subr.mxu0 0.0
    %150 = vmatpush1.msra.mxu0 0.0
    %151 = vmatprep.subr.mxu0 0.0
    %152 = vmatpush1.msra.mxu0 0.0
    %153 = vmatprep.subr.mxu0 0.0
    %154 = vmatpush1.msra.mxu0 0.0
    %155 = vmatprep.subr.mxu0 0.0
    %156 = vmatpush1.msra.mxu0 0.0
    %157 = vmatprep.subr.mxu0 0.0
    %158 = vmatpush1.msra.mxu0 0.0
    %159 = vmatprep.subr.mxu0 0.0
    %160 = vmatpush1.msra.mxu0 0.0
    %161 = vmatprep.subr.mxu0 0.0
    %162 = vmatpush1.msra.mxu0 0.0
    %163 = vmatprep.subr.mxu0 0.0
    %164 = vmatpush1.msra.mxu0 0.0
    %165 = vmatprep.subr.mxu0 0.0
    %166 = vmatpush1.msra.mxu0 0.0
    %167 = vmatprep.subr.mxu0 0.0
    %168 = vmatpush1.msra.mxu0 0.0
    %169 = vmatprep.subr.mxu0 0.0
    %170 = vmatpush1.msra.mxu0 0.0
    %171 = vmatprep.subr.mxu0 0.0
    %172 = vmatpush1.msra.mxu0 0.0
    %173 = vmatprep.subr.mxu0 0.0
    %174 = vmatpush1.msra.mxu0 0.0
    %175 = vmatprep.subr.mxu0 0.0
    %176 = vmatpush1.msra.mxu0 0.0
    %177 = vmatprep.subr.mxu0 0.0
    %178 = vmatpush1.msra.mxu0 0.0
    %179 = vmatprep.subr.mxu0 0.0
    %180 = vmatpush1.msra.mxu0 0.0
    %181 = vmatprep.subr.mxu0 0.0
    %182 = vmatpush1.msra.mxu0 0.0
    %183 = vmatprep.subr.mxu0 0.0
    %184 = vmatpush1.msra.mxu0 0.0
    %185 = vmatprep.subr.mxu0 0.0
    %186 = vmatpush1.msra.mxu0 0.0
    %187 = vmatprep.subr.mxu0 0.0
    %188 = vmatpush1.msra.mxu0 0.0
    %189 = vmatprep.subr.mxu0 0.0
    %190 = vmatpush1.msra.mxu0 0.0
    %191 = vmatprep.subr.mxu0 0.0
    %192 = vmatpush1.msra.mxu0 0.0
    %193 = vmatprep.subr.mxu0 0.0
    %194 = vmatpush1.msra.mxu0 0.0
    %195 = vmatprep.subr.mxu0 0.0
    %196 = vmatpush1.msra.mxu0 0.0
    %197 = vmatprep.subr.mxu0 0.0
    %198 = vmatpush1.msra.mxu0 0.0
    %199 = vmatprep.mubr.f32.mxu0 0.0
    %200 = vmatmul.mubr.f32.gmra.mrb[0].mxu0 %v133
    %v201 = vpop.f32.mrb[0].mxu0
    %v202 = vadd.f32 0.0, %v201
    %v203 = vpop.f32.mrb[0].mxu0
    %204 = vdwg.mxu0
    %v205 = vld [vmem:[#allocation8] sm:$0x1]
    %v207 = vlaneseq
    %v208 = vshrl.u32 %v207, 7
    %v209 = vsub.s32 0, %v208
    %v210 = vrot.slane %v205, %v209
    %v212 = vmul.f32 %v126, %v210
    %v213 = vsel %vm131, %v212, 0.0
    %214 = vadd.xlane.f32.xlu0 %v213
    %v215 = vpop.xlane.xlu0 %214
    %v216 = vld [vmem:[#allocation2] sm:$0xf]
    %v217 = vld [vmem:[#allocation2 + $0x4] sm:$0xf]
    %v218 = vld [vmem:[#allocation2 + $0x8] sm:$0xf]
    %v219 = vld [vmem:[#allocation2 + $0xc] sm:$0xf]
    %v220 = vld [vmem:[#allocation2 + $0x10] sm:$0xf]
    %v221 = vld [vmem:[#allocation2 + $0x14] sm:$0xf]
    %v222 = vld [vmem:[#allocation2 + $0x18] sm:$0xf]
    %v223 = vld [vmem:[#allocation2 + $0x1c] sm:$0xf]
    %v224 = vunpack.c.l.bf16 %v216
    %v225 = vunpack.c.l.bf16 %v217
    %v226 = vunpack.c.l.bf16 %v218
    %v227 = vunpack.c.l.bf16 %v219
    %v228 = vunpack.c.l.bf16 %v220
    %v229 = vunpack.c.l.bf16 %v221
    %v230 = vunpack.c.l.bf16 %v222
    %v231 = vunpack.c.l.bf16 %v223
    %v233 = vcombine.high %v202, %v202
    %v235 = vunpack.c.l.s4 1966171168
    %v236 = vunpack.c.0.s8 %v235
    %v237 = vlaneseq
    %v238 = vshrl.u32 %v237, 7
    %v239 = vsub.s32 %v236, %v238
    %v240 = vrot.slane %v202, %v239
    %v242 = vunpack.c.l.s4 1966171168
    %v243 = vunpack.c.0.s8 %v242
    %v244 = vlaneseq
    %v245 = vshrl.u32 %v244, 7
    %v246 = vsub.s32 %v243, %v245
    %v247 = vrot.slane %v233, %v246
    %v248 = vcombine.high %v240, %v240
    %v249 = vcombine.high %v247, %v247
    %v251 = vunpack.c.l.s4 1966171168
    %v252 = vunpack.c.0.s8 %v251
    %v253 = vlaneseq
    %v254 = vshrl.u32 %v253, 7
    %v255 = vsub.s32 %v252, %v254
    %v256 = vrot.slane %v240, %v255
    %v258 = vunpack.c.l.s4 1966171168
    %v259 = vunpack.c.0.s8 %v258
    %v260 = vlaneseq
    %v261 = vshrl.u32 %v260, 7
    %v262 = vsub.s32 %v259, %v261
    %v263 = vrot.slane %v247, %v262
    %v265 = vunpack.c.l.s4 1966171168
    %v266 = vunpack.c.0.s8 %v265
    %v267 = vlaneseq
    %v268 = vshrl.u32 %v267, 7
    %v269 = vsub.s32 %v266, %v268
    %v270 = vrot.slane %v248, %v269
    %v272 = vunpack.c.l.s4 1966171168
    %v273 = vunpack.c.0.s8 %v272
    %v274 = vlaneseq
    %v275 = vshrl.u32 %v274, 7
    %v276 = vsub.s32 %v273, %v275
    %v277 = vrot.slane %v249, %v276
    %v278 = vcombine.high %v256, %v256
    %v279 = vcombine.high %v263, %v263
    %v280 = vcombine.high %v270, %v270
    %v281 = vcombine.high %v277, %v277
    %v282 = vlaneseq
    %v283 = vshrl.u32 %v282, 7
    %v284 = vsub.s32 0, %v283
    %v285 = vrot.slane %v256, %v284
    %v286 = vlaneseq
    %v287 = vshrl.u32 %v286, 7
    %v288 = vsub.s32 0, %v287
    %v289 = vrot.slane %v270, %v288
    %v290 = vlaneseq
    %v291 = vshrl.u32 %v290, 7
    %v292 = vsub.s32 0, %v291
    %v293 = vrot.slane %v278, %v292
    %v294 = vlaneseq
    %v295 = vshrl.u32 %v294, 7
    %v296 = vsub.s32 0, %v295
    %v297 = vrot.slane %v280, %v296
    %v298 = vlaneseq
    %v299 = vshrl.u32 %v298, 7
    %v300 = vsub.s32 0, %v299
    %v301 = vrot.slane %v263, %v300
    %v302 = vlaneseq
    %v303 = vshrl.u32 %v302, 7
    %v304 = vsub.s32 0, %v303
    %v305 = vrot.slane %v277, %v304
    %v306 = vlaneseq
    %v307 = vshrl.u32 %v306, 7
    %v308 = vsub.s32 0, %v307
    %v309 = vrot.slane %v279, %v308
    %v310 = vlaneseq
    %v311 = vshrl.u32 %v310, 7
    %v312 = vsub.s32 0, %v311
    %v313 = vrot.slane %v281, %v312
    %v322 = vmul.f32 %v224, %v285
    %v323 = vmul.f32 %v225, %v289
    %v324 = vmul.f32 %v226, %v293
    %v325 = vmul.f32 %v227, %v297
    %v326 = vmul.f32 %v228, %v301
    %v327 = vmul.f32 %v229, %v305
    %v328 = vmul.f32 %v230, %v309
    %v329 = vmul.f32 %v231, %v313
    %v330 = vsel %vm131, %v322, 0.0
    %331 = vadd.xlane.f32.xlu0 %v330
    %v332 = vpop.xlane.xlu0 %331
    %v333 = vsel %vm131, %v323, 0.0
    %334 = vadd.xlane.f32.xlu0 %v333
    %v335 = vpop.xlane.xlu0 %334
    %v336 = vsel %vm131, %v324, 0.0
    %337 = vadd.xlane.f32.xlu0 %v336
    %v338 = vpop.xlane.xlu0 %337
    %v339 = vsel %vm131, %v325, 0.0
    %340 = vadd.xlane.f32.xlu0 %v339
    %v341 = vpop.xlane.xlu0 %340
    %v342 = vsel %vm131, %v326, 0.0
    %343 = vadd.xlane.f32.xlu0 %v342
    %v344 = vpop.xlane.xlu0 %343
    %v345 = vsel %vm131, %v327, 0.0
    %346 = vadd.xlane.f32.xlu0 %v345
    %v347 = vpop.xlane.xlu0 %346
    %v348 = vsel %vm131, %v328, 0.0
    %349 = vadd.xlane.f32.xlu0 %v348
    %v350 = vpop.xlane.xlu0 %349
    %v351 = vsel %vm131, %v329, 0.0
    %352 = vadd.xlane.f32.xlu0 %v351
    %v353 = vpop.xlane.xlu0 %352
    %v355 = vlaneseq
    %v356 = vshrl.u32 %v355, 7
    %v357 = vsub.s32 0, %v356
    %v358 = vrot.slane %v215, %v357
    %v359 = vlaneseq
    %v360 = vshrl.u32 %v359, 7
    %v361 = vsub.s32 1, %v360
    %v362 = vrot.slane %v215, %v361
    %v363 = vlaneseq
    %v364 = vshrl.u32 %v363, 7
    %v365 = vsub.s32 2, %v364
    %v366 = vrot.slane %v215, %v365
    %v367 = vlaneseq
    %v368 = vshrl.u32 %v367, 7
    %v369 = vsub.s32 3, %v368
    %v370 = vrot.slane %v215, %v369
    %v371 = vlaneseq
    %v372 = vshrl.u32 %v371, 7
    %v373 = vsub.s32 4, %v372
    %v374 = vrot.slane %v215, %v373
    %v375 = vlaneseq
    %v376 = vshrl.u32 %v375, 7
    %v377 = vsub.s32 5, %v376
    %v378 = vrot.slane %v215, %v377
    %v379 = vlaneseq
    %v380 = vshrl.u32 %v379, 7
    %v381 = vsub.s32 6, %v380
    %v382 = vrot.slane %v215, %v381
    %v383 = vlaneseq
    %v384 = vshrl.u32 %v383, 7
    %v385 = vsub.s32 7, %v384
    %v386 = vrot.slane %v215, %v385
    %v395 = vadd.f32 %v332, %v358
    %v396 = vadd.f32 %v335, %v362
    %v397 = vadd.f32 %v338, %v366
    %v398 = vadd.f32 %v341, %v370
    %v399 = vadd.f32 %v344, %v374
    %v400 = vadd.f32 %v347, %v378
    %v401 = vadd.f32 %v350, %v382
    %v402 = vadd.f32 %v353, %v386
    %v403 = vtanh.pop %v395
    %v404 = vtanh.pop %v396
    %v405 = vtanh.pop %v397
    %v406 = vtanh.pop %v398
    %v407 = vtanh.pop %v399
    %v408 = vtanh.pop %v400
    %v409 = vtanh.pop %v401
    %v410 = vtanh.pop %v402
    %419 = vset.pattern.permute.xlu0 0
    %420 = vperm.xlu0 %419, %v403
    %v421 = vpop.permute.xlu0 %420
    %422 = vset.pattern.permute.xlu0 0
    %423 = vperm.xlu0 %422, %v404
    %v424 = vpop.permute.xlu0 %423
    %425 = vset.pattern.permute.xlu0 0
    %426 = vperm.xlu0 %425, %v405
    %v427 = vpop.permute.xlu0 %426
    %428 = vset.pattern.permute.xlu0 0
    %429 = vperm.xlu0 %428, %v406
    %v430 = vpop.permute.xlu0 %429
    %431 = vset.pattern.permute.xlu0 0
    %432 = vperm.xlu0 %431, %v407
    %v433 = vpop.permute.xlu0 %432
    %434 = vset.pattern.permute.xlu0 0
    %435 = vperm.xlu0 %434, %v408
    %v436 = vpop.permute.xlu0 %435
    %437 = vset.pattern.permute.xlu0 0
    %438 = vperm.xlu0 %437, %v409
    %v439 = vpop.permute.xlu0 %438
    %440 = vset.pattern.permute.xlu0 0
    %441 = vperm.xlu0 %440, %v410
    %v442 = vpop.permute.xlu0 %441
    %v443 = vlaneseq
    %v444 = vand.u32 %v443, 127
    %v445 = vlaneseq
    %v446 = vshrl.u32 %v445, 7
    %v447 = vsub.s32 %v444, %v446
    %v448 = vrot.slane %v421, %v447
    %v449 = vlaneseq
    %v450 = vshrl.u32 %v449, 7
    %v451 = vsub.s32 %v444, %v450
    %v452 = vrot.slane %v424, %v451
    %v453 = vlaneseq
    %v454 = vshrl.u32 %v453, 7
    %v455 = vsub.s32 %v444, %v454
    %v456 = vrot.slane %v427, %v455
    %v457 = vlaneseq
    %v458 = vshrl.u32 %v457, 7
    %v459 = vsub.s32 %v444, %v458
    %v460 = vrot.slane %v430, %v459
    %v461 = vlaneseq
    %v462 = vshrl.u32 %v461, 7
    %v463 = vsub.s32 %v444, %v462
    %v464 = vrot.slane %v433, %v463
    %v465 = vlaneseq
    %v466 = vshrl.u32 %v465, 7
    %v467 = vsub.s32 %v444, %v466
    %v468 = vrot.slane %v436, %v467
    %v469 = vlaneseq
    %v470 = vshrl.u32 %v469, 7
    %v471 = vsub.s32 %v444, %v470
    %v472 = vrot.slane %v439, %v471
    %v473 = vlaneseq
    %v474 = vshrl.u32 %v473, 7
    %v475 = vsub.s32 %v444, %v474
    %v476 = vrot.slane %v442, %v475
    %vm477 = vcmask 1041409
    %v478 = vsel %vm477, %v452, %v448
    %vm479 = vcmask 1042434
    %v480 = vsel %vm479, %v456, %v478
    %vm481 = vcmask 1043459
    %v482 = vsel %vm481, %v460, %v480
    %vm483 = vcmask 1044484
    %v484 = vsel %vm483, %v464, %v482
    %vm485 = vcmask 1045509
    %v486 = vsel %vm485, %v468, %v484
    %vm487 = vcmask 1046534
    %v488 = vsel %vm487, %v472, %v486
    %vm489 = vcmask 1047559
    %v490 = vsel %vm489, %v476, %v488
    %vm492 = vcmask 64512
    %v493 = vsel %vm492, %v490, -inf
    %494 = vmax.xlane.f32.xlu0 %v493
    %v495 = vpop.xlane.xlu0 %494
    %v497 = vlaneseq
    %v498 = vshrl.u32 %v497, 7
    %v499 = vsub.s32 0, %v498
    %v500 = vrot.slane %v495, %v499
    %v501 = vlaneseq
    %v502 = vshrl.u32 %v501, 7
    %v503 = vsub.s32 1, %v502
    %v504 = vrot.slane %v495, %v503
    %v505 = vlaneseq
    %v506 = vshrl.u32 %v505, 7
    %v507 = vsub.s32 2, %v506
    %v508 = vrot.slane %v495, %v507
    %v509 = vlaneseq
    %v510 = vshrl.u32 %v509, 7
    %v511 = vsub.s32 3, %v510
    %v512 = vrot.slane %v495, %v511
    %v513 = vlaneseq
    %v514 = vshrl.u32 %v513, 7
    %v515 = vsub.s32 4, %v514
    %v516 = vrot.slane %v495, %v515
    %v517 = vlaneseq
    %v518 = vshrl.u32 %v517, 7
    %v519 = vsub.s32 5, %v518
    %v520 = vrot.slane %v495, %v519
    %v521 = vlaneseq
    %v522 = vshrl.u32 %v521, 7
    %v523 = vsub.s32 6, %v522
    %v524 = vrot.slane %v495, %v523
    %v525 = vlaneseq
    %v526 = vshrl.u32 %v525, 7
    %v527 = vsub.s32 7, %v526
    %v528 = vrot.slane %v495, %v527
    %v537 = vsub.f32 %v403, %v500
    %v538 = vsub.f32 %v404, %v504
    %v539 = vsub.f32 %v405, %v508
    %v540 = vsub.f32 %v406, %v512
    %v541 = vsub.f32 %v407, %v516
    %v542 = vsub.f32 %v408, %v520
    %v543 = vsub.f32 %v409, %v524
    %v544 = vsub.f32 %v410, %v528
    %v545 = vmul.f32 %v537, 1.442695
    %v546 = vpow.pop %v545
    %v547 = vmul.f32 %v538, 1.442695
    %v548 = vpow.pop %v547
    %v549 = vmul.f32 %v539, 1.442695
    %v550 = vpow.pop %v549
    %v551 = vmul.f32 %v540, 1.442695
    %v552 = vpow.pop %v551
    %v553 = vmul.f32 %v541, 1.442695
    %v554 = vpow.pop %v553
    %v555 = vmul.f32 %v542, 1.442695
    %v556 = vpow.pop %v555
    %v557 = vmul.f32 %v543, 1.442695
    %v558 = vpow.pop %v557
    %v559 = vmul.f32 %v544, 1.442695
    %v560 = vpow.pop %v559
    %569 = vset.pattern.permute.xlu0 0
    %570 = vperm.xlu0 %569, %v546
    %v571 = vpop.permute.xlu0 %570
    %572 = vset.pattern.permute.xlu0 0
    %573 = vperm.xlu0 %572, %v548
    %v574 = vpop.permute.xlu0 %573
    %575 = vset.pattern.permute.xlu0 0
    %576 = vperm.xlu0 %575, %v550
    %v577 = vpop.permute.xlu0 %576
    %578 = vset.pattern.permute.xlu0 0
    %579 = vperm.xlu0 %578, %v552
    %v580 = vpop.permute.xlu0 %579
    %581 = vset.pattern.permute.xlu0 0
    %582 = vperm.xlu0 %581, %v554
    %v583 = vpop.permute.xlu0 %582
    %584 = vset.pattern.permute.xlu0 0
    %585 = vperm.xlu0 %584, %v556
    %v586 = vpop.permute.xlu0 %585
    %587 = vset.pattern.permute.xlu0 0
    %588 = vperm.xlu0 %587, %v558
    %v589 = vpop.permute.xlu0 %588
    %590 = vset.pattern.permute.xlu0 0
    %591 = vperm.xlu0 %590, %v560
    %v592 = vpop.permute.xlu0 %591
    %v593 = vlaneseq
    %v594 = vshrl.u32 %v593, 7
    %v595 = vsub.s32 %v444, %v594
    %v596 = vrot.slane %v571, %v595
    %v597 = vlaneseq
    %v598 = vshrl.u32 %v597, 7
    %v599 = vsub.s32 %v444, %v598
    %v600 = vrot.slane %v574, %v599
    %v601 = vlaneseq
    %v602 = vshrl.u32 %v601, 7
    %v603 = vsub.s32 %v444, %v602
    %v604 = vrot.slane %v577, %v603
    %v605 = vlaneseq
    %v606 = vshrl.u32 %v605, 7
    %v607 = vsub.s32 %v444, %v606
    %v608 = vrot.slane %v580, %v607
    %v609 = vlaneseq
    %v610 = vshrl.u32 %v609, 7
    %v611 = vsub.s32 %v444, %v610
    %v612 = vrot.slane %v583, %v611
    %v613 = vlaneseq
    %v614 = vshrl.u32 %v613, 7
    %v615 = vsub.s32 %v444, %v614
    %v616 = vrot.slane %v586, %v615
    %v617 = vlaneseq
    %v618 = vshrl.u32 %v617, 7
    %v619 = vsub.s32 %v444, %v618
    %v620 = vrot.slane %v589, %v619
    %v621 = vlaneseq
    %v622 = vshrl.u32 %v621, 7
    %v623 = vsub.s32 %v444, %v622
    %v624 = vrot.slane %v592, %v623
    %v625 = vsel %vm477, %v600, %v596
    %v626 = vsel %vm479, %v604, %v625
    %v627 = vsel %vm481, %v608, %v626
    %v628 = vsel %vm483, %v612, %v627
    %v629 = vsel %vm485, %v616, %v628
    %v630 = vsel %vm487, %v620, %v629
    %v631 = vsel %vm489, %v624, %v630
    %v633 = vsel %vm492, %v631, 0.0
    %634 = vadd.xlane.f32.xlu0 %v633
    %v635 = vpop.xlane.xlu0 %634
    %v636 = vrcp.pop %v635
    %v638 = vlaneseq
    %v639 = vshrl.u32 %v638, 7
    %v640 = vsub.s32 0, %v639
    %v641 = vrot.slane %v636, %v640
    %v642 = vlaneseq
    %v643 = vshrl.u32 %v642, 7
    %v644 = vsub.s32 1, %v643
    %v645 = vrot.slane %v636, %v644
    %v646 = vlaneseq
    %v647 = vshrl.u32 %v646, 7
    %v648 = vsub.s32 2, %v647
    %v649 = vrot.slane %v636, %v648
    %v650 = vlaneseq
    %v651 = vshrl.u32 %v650, 7
    %v652 = vsub.s32 3, %v651
    %v653 = vrot.slane %v636, %v652
    %v654 = vlaneseq
    %v655 = vshrl.u32 %v654, 7
    %v656 = vsub.s32 4, %v655
    %v657 = vrot.slane %v636, %v656
    %v658 = vlaneseq
    %v659 = vshrl.u32 %v658, 7
    %v660 = vsub.s32 5, %v659
    %v661 = vrot.slane %v636, %v660
    %v662 = vlaneseq
    %v663 = vshrl.u32 %v662, 7
    %v664 = vsub.s32 6, %v663
    %v665 = vrot.slane %v636, %v664
    %v666 = vlaneseq
    %v667 = vshrl.u32 %v666, 7
    %v668 = vsub.s32 7, %v667
    %v669 = vrot.slane %v636, %v668
    %v678 = vmul.f32 %v546, %v641
    %v679 = vmul.f32 %v548, %v645
    %v680 = vmul.f32 %v550, %v649
    %v681 = vmul.f32 %v552, %v653
    %v682 = vmul.f32 %v554, %v657
    %v683 = vmul.f32 %v556, %v661
    %v684 = vmul.f32 %v558, %v665
    %v685 = vmul.f32 %v560, %v669
    %694 = vset.pattern.permute.xlu0 0
    %695 = vperm.xlu0 %694, %v678
    %v696 = vpop.permute.xlu0 %695
    %697 = vset.pattern.permute.xlu0 0
    %698 = vperm.xlu0 %697, %v679
    %v699 = vpop.permute.xlu0 %698
    %700 = vset.pattern.permute.xlu0 0
    %701 = vperm.xlu0 %700, %v680
    %v702 = vpop.permute.xlu0 %701
    %703 = vset.pattern.permute.xlu0 0
    %704 = vperm.xlu0 %703, %v681
    %v705 = vpop.permute.xlu0 %704
    %706 = vset.pattern.permute.xlu0 0
    %707 = vperm.xlu0 %706, %v682
    %v708 = vpop.permute.xlu0 %707
    %709 = vset.pattern.permute.xlu0 0
    %710 = vperm.xlu0 %709, %v683
    %v711 = vpop.permute.xlu0 %710
    %712 = vset.pattern.permute.xlu0 0
    %713 = vperm.xlu0 %712, %v684
    %v714 = vpop.permute.xlu0 %713
    %715 = vset.pattern.permute.xlu0 0
    %716 = vperm.xlu0 %715, %v685
    %v717 = vpop.permute.xlu0 %716
    %v718 = vlaneseq
    %v719 = vshrl.u32 %v718, 7
    %v720 = vsub.s32 %v444, %v719
    %v721 = vrot.slane %v696, %v720
    %v722 = vlaneseq
    %v723 = vshrl.u32 %v722, 7
    %v724 = vsub.s32 %v444, %v723
    %v725 = vrot.slane %v699, %v724
    %v726 = vlaneseq
    %v727 = vshrl.u32 %v726, 7
    %v728 = vsub.s32 %v444, %v727
    %v729 = vrot.slane %v702, %v728
    %v730 = vlaneseq
    %v731 = vshrl.u32 %v730, 7
    %v732 = vsub.s32 %v444, %v731
    %v733 = vrot.slane %v705, %v732
    %v734 = vlaneseq
    %v735 = vshrl.u32 %v734, 7
    %v736 = vsub.s32 %v444, %v735
    %v737 = vrot.slane %v708, %v736
    %v738 = vlaneseq
    %v739 = vshrl.u32 %v738, 7
    %v740 = vsub.s32 %v444, %v739
    %v741 = vrot.slane %v711, %v740
    %v742 = vlaneseq
    %v743 = vshrl.u32 %v742, 7
    %v744 = vsub.s32 %v444, %v743
    %v745 = vrot.slane %v714, %v744
    %v746 = vlaneseq
    %v747 = vshrl.u32 %v746, 7
    %v748 = vsub.s32 %v444, %v747
    %v749 = vrot.slane %v717, %v748
    %v750 = vsel %vm477, %v725, %v721
    %v751 = vsel %vm479, %v729, %v750
    %v752 = vsel %vm481, %v733, %v751
    %v753 = vsel %vm483, %v737, %v752
    %v754 = vsel %vm485, %v741, %v753
    %v755 = vsel %vm487, %v745, %v754
    %v756 = vsel %vm489, %v749, %v755
    %758 = vst.msk [vmem:[#allocation17] sm:$0xff] %vm492, %v756
    %v759 = vmul.f32 %v224, %v224
    %v760 = vmul.f32 %v225, %v225
    %v761 = vmul.f32 %v226, %v226
    %v762 = vmul.f32 %v227, %v227
    %v763 = vmul.f32 %v228, %v228
    %v764 = vmul.f32 %v229, %v229
    %v765 = vmul.f32 %v230, %v230
    %v766 = vmul.f32 %v231, %v231
    %v767 = vsel %vm131, %v759, 0.0
    %768 = vadd.xlane.f32.xlu0 %v767
    %v769 = vpop.xlane.xlu0 %768
    %v770 = vsel %vm131, %v760, 0.0
    %771 = vadd.xlane.f32.xlu0 %v770
    %v772 = vpop.xlane.xlu0 %771
    %v773 = vsel %vm131, %v761, 0.0
    %774 = vadd.xlane.f32.xlu0 %v773
    %v775 = vpop.xlane.xlu0 %774
    %v776 = vsel %vm131, %v762, 0.0
    %777 = vadd.xlane.f32.xlu0 %v776
    %v778 = vpop.xlane.xlu0 %777
    %v779 = vsel %vm131, %v763, 0.0
    %780 = vadd.xlane.f32.xlu0 %v779
    %v781 = vpop.xlane.xlu0 %780
    %v782 = vsel %vm131, %v764, 0.0
    %783 = vadd.xlane.f32.xlu0 %v782
    %v784 = vpop.xlane.xlu0 %783
    %v785 = vsel %vm131, %v765, 0.0
    %786 = vadd.xlane.f32.xlu0 %v785
    %v787 = vpop.xlane.xlu0 %786
    %v788 = vsel %vm131, %v766, 0.0
    %789 = vadd.xlane.f32.xlu0 %v788
    %v790 = vpop.xlane.xlu0 %789
    %v791 = vsub.f32 1.0, %v678
    %v792 = vsub.f32 1.0, %v679
    %v793 = vsub.f32 1.0, %v680
    %v794 = vsub.f32 1.0, %v681
    %v795 = vsub.f32 1.0, %v682
    %v796 = vsub.f32 1.0, %v683
    %v797 = vsub.f32 1.0, %v684
    %v798 = vsub.f32 1.0, %v685
    %v799 = vmul.f32 %v791, %v791
    %v800 = vmul.f32 %v792, %v792
    %v801 = vmul.f32 %v793, %v793
    %v802 = vmul.f32 %v794, %v794
    %v803 = vmul.f32 %v795, %v795
    %v804 = vmul.f32 %v796, %v796
    %v805 = vmul.f32 %v797, %v797
    %v806 = vmul.f32 %v798, %v798
    %v807 = vmul.f32 %v799, %v769
    %v808 = vmul.f32 %v800, %v772
    %v809 = vmul.f32 %v801, %v775
    %v810 = vmul.f32 %v802, %v778
    %v811 = vmul.f32 %v803, %v781
    %v812 = vmul.f32 %v804, %v784
    %v813 = vmul.f32 %v805, %v787
    %v814 = vmul.f32 %v806, %v790
    %823 = vset.pattern.permute.xlu0 0
    %824 = vperm.xlu0 %823, %v807
    %v825 = vpop.permute.xlu0 %824
    %826 = vset.pattern.permute.xlu0 0
    %827 = vperm.xlu0 %826, %v808
    %v828 = vpop.permute.xlu0 %827
    %829 = vset.pattern.permute.xlu0 0
    %830 = vperm.xlu0 %829, %v809
    %v831 = vpop.permute.xlu0 %830
    %832 = vset.pattern.permute.xlu0 0
    %833 = vperm.xlu0 %832, %v810
    %v834 = vpop.permute.xlu0 %833
    %835 = vset.pattern.permute.xlu0 0
    %836 = vperm.xlu0 %835, %v811
    %v837 = vpop.permute.xlu0 %836
    %838 = vset.pattern.permute.xlu0 0
    %839 = vperm.xlu0 %838, %v812
    %v840 = vpop.permute.xlu0 %839
    %841 = vset.pattern.permute.xlu0 0
    %842 = vperm.xlu0 %841, %v813
    %v843 = vpop.permute.xlu0 %842
    %844 = vset.pattern.permute.xlu0 0
    %845 = vperm.xlu0 %844, %v814
    %v846 = vpop.permute.xlu0 %845
    %v847 = vlaneseq
    %v848 = vshrl.u32 %v847, 7
    %v849 = vsub.s32 %v444, %v848
    %v850 = vrot.slane %v825, %v849
    %v851 = vlaneseq
    %v852 = vshrl.u32 %v851, 7
    %v853 = vsub.s32 %v444, %v852
    %v854 = vrot.slane %v828, %v853
    %v855 = vlaneseq
    %v856 = vshrl.u32 %v855, 7
    %v857 = vsub.s32 %v444, %v856
    %v858 = vrot.slane %v831, %v857
    %v859 = vlaneseq
    %v860 = vshrl.u32 %v859, 7
    %v861 = vsub.s32 %v444, %v860
    %v862 = vrot.slane %v834, %v861
    %v863 = vlaneseq
    %v864 = vshrl.u32 %v863, 7
    %v865 = vsub.s32 %v444, %v864
    %v866 = vrot.slane %v837, %v865
    %v867 = vlaneseq
    %v868 = vshrl.u32 %v867, 7
    %v869 = vsub.s32 %v444, %v868
    %v870 = vrot.slane %v840, %v869
    %v871 = vlaneseq
    %v872 = vshrl.u32 %v871, 7
    %v873 = vsub.s32 %v444, %v872
    %v874 = vrot.slane %v843, %v873
    %v875 = vlaneseq
    %v876 = vshrl.u32 %v875, 7
    %v877 = vsub.s32 %v444, %v876
    %v878 = vrot.slane %v846, %v877
    %v879 = vsel %vm477, %v854, %v850
    %v880 = vsel %vm479, %v858, %v879
    %v881 = vsel %vm481, %v862, %v880
    %v882 = vsel %vm483, %v866, %v881
    %v883 = vsel %vm485, %v870, %v882
    %v884 = vsel %vm487, %v874, %v883
    %v885 = vsel %vm489, %v878, %v884
    %v887 = vsel %vm492, %v885, 0.0
    %888 = vadd.xlane.f32.xlu0 %v887
    %v889 = vpop.xlane.xlu0 %888
    %vm890 = vcmask 7168
    %891 = vst.msk [vmem:[#allocation15] sm:$0xff] %vm890, %v889
    %v900 = vmul.f32 %v224, %v696
    %v901 = vmul.f32 %v225, %v699
    %v902 = vmul.f32 %v226, %v702
    %v903 = vmul.f32 %v227, %v705
    %v904 = vmul.f32 %v228, %v708
    %v905 = vmul.f32 %v229, %v711
    %v906 = vmul.f32 %v230, %v714
    %v907 = vmul.f32 %v231, %v717
    %v908 = vsel %vm131, %v900, 0.0
    %v909 = vrot.slane %v908, 4
    %v910 = vadd.f32 %v908, %v909
    %v911 = vrot.slane %v910, 2
    %v912 = vadd.f32 %v910, %v911
    %v913 = vrot.slane %v912, 1
    %v914 = vadd.f32 %v912, %v913
    %v915 = vsel %vm131, %v901, 0.0
    %v916 = vrot.slane %v915, 4
    %v917 = vadd.f32 %v915, %v916
    %v918 = vrot.slane %v917, 2
    %v919 = vadd.f32 %v917, %v918
    %v920 = vrot.slane %v919, 1
    %v921 = vadd.f32 %v919, %v920
    %v922 = vsel %vm131, %v902, 0.0
    %v923 = vrot.slane %v922, 4
    %v924 = vadd.f32 %v922, %v923
    %v925 = vrot.slane %v924, 2
    %v926 = vadd.f32 %v924, %v925
    %v927 = vrot.slane %v926, 1
    %v928 = vadd.f32 %v926, %v927
    %v929 = vsel %vm131, %v903, 0.0
    %v930 = vrot.slane %v929, 4
    %v931 = vadd.f32 %v929, %v930
    %v932 = vrot.slane %v931, 2
    %v933 = vadd.f32 %v931, %v932
    %v934 = vrot.slane %v933, 1
    %v935 = vadd.f32 %v933, %v934
    %v936 = vsel %vm131, %v904, 0.0
    %v937 = vrot.slane %v936, 4
    %v938 = vadd.f32 %v936, %v937
    %v939 = vrot.slane %v938, 2
    %v940 = vadd.f32 %v938, %v939
    %v941 = vrot.slane %v940, 1
    %v942 = vadd.f32 %v940, %v941
    %v943 = vsel %vm131, %v905, 0.0
    %v944 = vrot.slane %v943, 4
    %v945 = vadd.f32 %v943, %v944
    %v946 = vrot.slane %v945, 2
    %v947 = vadd.f32 %v945, %v946
    %v948 = vrot.slane %v947, 1
    %v949 = vadd.f32 %v947, %v948
    %v950 = vsel %vm131, %v906, 0.0
    %v951 = vrot.slane %v950, 4
    %v952 = vadd.f32 %v950, %v951
    %v953 = vrot.slane %v952, 2
    %v954 = vadd.f32 %v952, %v953
    %v955 = vrot.slane %v954, 1
    %v956 = vadd.f32 %v954, %v955
    %v957 = vsel %vm131, %v907, 0.0
    %v958 = vrot.slane %v957, 4
    %v959 = vadd.f32 %v957, %v958
    %v960 = vrot.slane %v959, 2
    %v961 = vadd.f32 %v959, %v960
    %v962 = vrot.slane %v961, 1
    %v963 = vadd.f32 %v961, %v962
    %v964 = vpack.c.bf16 %v914, %v914
    %v965 = vpack.c.bf16 %v921, %v921
    %v966 = vpack.c.bf16 %v928, %v928
    %v967 = vpack.c.bf16 %v935, %v935
    %v968 = vpack.c.bf16 %v942, %v942
    %v969 = vpack.c.bf16 %v949, %v949
    %v970 = vpack.c.bf16 %v956, %v956
    %v971 = vpack.c.bf16 %v963, %v963
    %v972 = vld [vmem:[#allocation10] sm:$0xf]
    %v973 = vld [vmem:[#allocation10 + $0x4] sm:$0xf]
    %v974 = vld [vmem:[#allocation10 + $0x8] sm:$0xf]
    %v975 = vld [vmem:[#allocation10 + $0xc] sm:$0xf]
    %v976 = vpack.c.bf16 %v126, %v126
    %v977 = vld [vmem:[#allocation11] sm:$0xf]
    %v978 = vld [vmem:[#allocation11 + $0x4] sm:$0xf]
    %v979 = vld [vmem:[#allocation11 + $0x8] sm:$0xf]
    %v980 = vld [vmem:[#allocation11 + $0xc] sm:$0xf]
    %v985 = vunpack.c.l.b16 %v977
    %v986 = vunpack.c.l.b16 %v978
    %v987 = vunpack.c.l.b16 %v979
    %v988 = vunpack.c.l.b16 %v980
    %v989 = vpack.c.b16 %v986, %v985
    %v990 = vpack.c.b16 %v988, %v987
    %v994 = vsel %vm131, %v976, 0
    %996 = vmatprep.subr.bf16.mxu0 0
    %997 = vmatpush1.bf16.msra.mxu0 %v989
    %998 = vmatprep.subr.bf16.mxu0 0
    %999 = vmatpush1.bf16.msra.mxu0 %v990
    %1000 = vmatprep.subr.bf16.mxu0 0
    %1001 = vmatpush1.bf16.msra.mxu0 0
    %1002 = vmatprep.subr.bf16.mxu0 0
    %1003 = vmatpush1.bf16.msra.mxu0 0
    %1004 = vmatprep.subr.bf16.mxu0 0
    %1005 = vmatpush1.bf16.msra.mxu0 0
    %1006 = vmatprep.subr.bf16.mxu0 0
    %1007 = vmatpush1.bf16.msra.mxu0 0
    %1008 = vmatprep.subr.bf16.mxu0 0
    %1009 = vmatpush1.bf16.msra.mxu0 0
    %1010 = vmatprep.subr.bf16.mxu0 0
    %1011 = vmatpush1.bf16.msra.mxu0 0
    %1012 = vmatprep.subr.bf16.mxu0 0
    %1013 = vmatpush1.bf16.msra.mxu0 0
    %1014 = vmatprep.subr.bf16.mxu0 0
    %1015 = vmatpush1.bf16.msra.mxu0 0
    %1016 = vmatprep.subr.bf16.mxu0 0
    %1017 = vmatpush1.bf16.msra.mxu0 0
    %1018 = vmatprep.subr.bf16.mxu0 0
    %1019 = vmatpush1.bf16.msra.mxu0 0
    %1020 = vmatprep.subr.bf16.mxu0 0
    %1021 = vmatpush1.bf16.msra.mxu0 0
    %1022 = vmatprep.subr.bf16.mxu0 0
    %1023 = vmatpush1.bf16.msra.mxu0 0
    %1024 = vmatprep.subr.bf16.mxu0 0
    %1025 = vmatpush1.bf16.msra.mxu0 0
    %1026 = vmatprep.subr.bf16.mxu0 0
    %1027 = vmatpush1.bf16.msra.mxu0 0
    %1028 = vmatprep.mubr.bf16.mxu0 0
    %1029 = vmatmul.mubr.bf16.gmra.mrb[0].mxu0 %v994
    %v1030 = vpop.f32.mrb[0].mxu0
    %v1031 = vadd.f32 0.0, %v1030
    %v1032 = vpop.f32.mrb[0].mxu0
    %v1033 = vpop.f32.mrb[0].mxu0
    %v1034 = vpop.f32.mrb[0].mxu0
    %1035 = vdwg.mxu0
    %v1044 = vunpack.c.l.b16 %v964
    %v1045 = vunpack.c.l.b16 %v965
    %v1046 = vunpack.c.l.b16 %v966
    %v1047 = vunpack.c.l.b16 %v967
    %v1048 = vunpack.c.l.b16 %v968
    %v1049 = vunpack.c.l.b16 %v969
    %v1050 = vunpack.c.l.b16 %v970
    %v1051 = vunpack.c.l.b16 %v971
    %v1052 = vsel %vm477, %v1045, %v1044
    %v1053 = vsel %vm479, %v1046, %v1052
    %v1054 = vsel %vm481, %v1047, %v1053
    %v1055 = vsel %vm483, %v1048, %v1054
    %v1056 = vsel %vm485, %v1049, %v1055
    %v1057 = vsel %vm487, %v1050, %v1056
    %v1058 = vsel %vm489, %v1051, %v1057
    %v1059 = vpack.c.b16 %v1058, %v1058
    %v1064 = vunpack.c.l.b16 %v972
    %v1065 = vunpack.c.l.b16 %v973
    %v1066 = vunpack.c.l.b16 %v974
    %v1067 = vunpack.c.l.b16 %v975
    %v1068 = vpack.c.b16 %v1065, %v1064
    %v1069 = vpack.c.b16 %v1067, %v1066
    %v1073 = vsel %vm131, %v1059, 0
    %1075 = vmatprep.subr.bf16.mxu0 0
    %1076 = vmatpush1.bf16.msra.mxu0 %v1068
    %1077 = vmatprep.subr.bf16.mxu0 0
    %1078 = vmatpush1.bf16.msra.mxu0 %v1069
    %1079 = vmatprep.subr.bf16.mxu0 0
    %1080 = vmatpush1.bf16.msra.mxu0 0
    %1081 = vmatprep.subr.bf16.mxu0 0
    %1082 = vmatpush1.bf16.msra.mxu0 0
    %1083 = vmatprep.subr.bf16.mxu0 0
    %1084 = vmatpush1.bf16.msra.mxu0 0
    %1085 = vmatprep.subr.bf16.mxu0 0
    %1086 = vmatpush1.bf16.msra.mxu0 0
    %1087 = vmatprep.subr.bf16.mxu0 0
    %1088 = vmatpush1.bf16.msra.mxu0 0
    %1089 = vmatprep.subr.bf16.mxu0 0
    %1090 = vmatpush1.bf16.msra.mxu0 0
    %1091 = vmatprep.subr.bf16.mxu0 0
    %1092 = vmatpush1.bf16.msra.mxu0 0
    %1093 = vmatprep.subr.bf16.mxu0 0
    %1094 = vmatpush1.bf16.msra.mxu0 0
    %1095 = vmatprep.subr.bf16.mxu0 0
    %1096 = vmatpush1.bf16.msra.mxu0 0
    %1097 = vmatprep.subr.bf16.mxu0 0
    %1098 = vmatpush1.bf16.msra.mxu0 0
    %1099 = vmatprep.subr.bf16.mxu0 0
    %1100 = vmatpush1.bf16.msra.mxu0 0
    %1101 = vmatprep.subr.bf16.mxu0 0
    %1102 = vmatpush1.bf16.msra.mxu0 0
    %1103 = vmatprep.subr.bf16.mxu0 0
    %1104 = vmatpush1.bf16.msra.mxu0 0
    %1105 = vmatprep.subr.bf16.mxu0 0
    %1106 = vmatpush1.bf16.msra.mxu0 0
    %1107 = vmatprep.mubr.bf16.mxu0 0
    %1108 = vmatmul.mubr.bf16.gmra.mrb[0].mxu0 %v1073
    %v1109 = vpop.f32.mrb[0].mxu0
    %v1110 = vadd.f32 %v1031, %v1109
    %v1111 = vpop.f32.mrb[0].mxu0
    %v1112 = vpop.f32.mrb[0].mxu0
    %v1113 = vpop.f32.mrb[0].mxu0
    %1114 = vdwg.mxu0
    %v1115 = vld [vmem:[#allocation13] sm:$0x1]
    %v1117 = vlaneseq
    %v1118 = vshrl.u32 %v1117, 7
    %v1119 = vsub.s32 0, %v1118
    %v1120 = vrot.slane %v1115, %v1119
    %v1122 = vadd.f32 %v1110, %v1120
    %v1123 = vtanh.pop %v1122
    %1124 = vst.msk [vmem:[#allocation14] sm:$0xff] %vm131, %v1123
    // Predicated region
    $region58: #{tpu_custom_call.1} parent=1 // pred_check
      _
    $region59: #{tpu_custom_call.1} parent=1 // pred_check_branch
      %1126 = sbr.rel (0) target = $region61
    $region60: #{tpu_custom_call.1} parent=1 // pred_region
      %s1128 = ssub.s32 128, 128
      %1129 = vsyncadd [#allocation4], %s1128
      %s1131 = sshll.u32 [#allocation14], 4
      %s1132 = int_to_ptr.vmem [resolvable:$true] %s1131
      %1134 = dma.vmem_to_hbm [thread:$0]  %s1132, 128, %s7, [#allocation4]
    $region61: #{tpu_custom_call.1} parent=1 // pred_fallthru
      _
    // Predicated region
    $region62: #{tpu_custom_call.1} parent=1 // pred_check
      _
    $region63: #{tpu_custom_call.1} parent=1 // pred_check_branch
      %1136 = sbr.rel (0) target = $region65
    $region64: #{tpu_custom_call.1} parent=1 // pred_region
      %s1138 = ssub.s32 128, 128
      %1139 = vsyncadd [#allocation16], %s1138
      %s1141 = sshll.u32 [#allocation15], 4
      %s1142 = int_to_ptr.vmem [resolvable:$true] %s1141
      %1144 = dma.vmem_to_hbm [thread:$0]  %s1142, 128, %s8, [#allocation16]
    $region65: #{tpu_custom_call.1} parent=1 // pred_fallthru
      _
    // Predicated region
    $region66: #{tpu_custom_call.1} parent=1 // pred_check
      _
    $region67: #{tpu_custom_call.1} parent=1 // pred_check_branch
      %1146 = sbr.rel (0) target = $region69
    $region68: #{tpu_custom_call.1} parent=1 // pred_region
      %s1148 = ssub.s32 128, 128
      %1149 = vsyncadd [#allocation16], %s1148
      %s1151 = sshll.u32 [#allocation17], 4
      %s1152 = int_to_ptr.vmem [resolvable:$true] %s1151
      %1154 = dma.vmem_to_hbm [thread:$0]  %s1152, 128, %s9, [#allocation16]
    $region69: #{tpu_custom_call.1} parent=1 // pred_fallthru
      _
    // Predicated region
    $region70: #{tpu_custom_call.1} parent=1 // pred_check
      _
    $region71: #{tpu_custom_call.1} parent=1 // pred_check_branch
      %1156 = sbr.rel (0) target = $region73
    $region72: #{tpu_custom_call.1} parent=1 // pred_region
      %1157 = dma.done [#allocation4], 128
    $region73: #{tpu_custom_call.1} parent=1 // pred_fallthru
      _
    // Predicated region
    $region74: #{tpu_custom_call.1} parent=1 // pred_check
      _
    $region75: #{tpu_custom_call.1} parent=1 // pred_check_branch
      %1159 = sbr.rel (0) target = $region77
    $region76: #{tpu_custom_call.1} parent=1 // pred_region
      %1160 = dma.done [#allocation16], 128
    $region77: #{tpu_custom_call.1} parent=1 // pred_fallthru
      _
    // Predicated region
    $region78: #{tpu_custom_call.1} parent=1 // pred_check
      _
    $region79: #{tpu_custom_call.1} parent=1 // pred_check_branch
      %1162 = sbr.rel (0) target = $region81
    $region80: #{tpu_custom_call.1} parent=1 // pred_region
      %1163 = dma.done [#allocation16], 128
    $region81: #{tpu_custom_call.1} parent=1 // pred_fallthru
      _
    %1164 = vsyncpa [#allocation3], 1
    %1165 = vsyncpa [#allocation6], 1
    %1166 = vsyncpa [#allocation9], 1
    %1167 = vsyncpa [#allocation12], 1
    %1168 = vsyncpa [#allocation4], 1
    %1169 = vsyncpa [#allocation16], 1

</llo_original>
